<compile_context>
chip_gen: v5e
topology: v5e:2x2
jax: 0.10.0
libtpu: 0.0.40
codegen_flags: <defaults>
</compile_context>

<pallas_src>
import math

import jax
import jax.numpy as jnp
from jax import lax
from jax.experimental import pallas as pl
from jax.experimental.pallas import tpu as pltpu


# ---------------------------------------------------------------------------
# Generation-gated VMEM budgets
# ---------------------------------------------------------------------------
def _vmem_budgets():
    """Returns (tile_budget_bytes, vmem_limit_bytes, tb_cap_rows)."""
    cap_bytes = 64 * 1024 * 1024
    try:
        info = pltpu.get_tpu_info()
        cap_bytes = int(getattr(info, "vmem_capacity_bytes", cap_bytes))
    except Exception:
        pass
    if cap_bytes >= 96 * 1024 * 1024:        # v5e / v6e: 128 MiB physical VMEM
        return 48 * 1024 * 1024, 64 * 1024 * 1024, 2048
    # v7x (64 MiB physical) or unknown: stay conservative.
    return 24 * 1024 * 1024, 32 * 1024 * 1024, 1024


# ---------------------------------------------------------------------------
# Branch 1: event-trigger prediction (streamed online-softmax attention)
# ---------------------------------------------------------------------------
def _make_event_kernel(N, TN, H):
    needs_mask = (N % TN) != 0
    inv_sqrt_h = 1.0 / math.sqrt(H)

    def kernel(ctx_ref, q_ref, w_ref, b_ref, o_ref, m_sc, l_sc, acc_sc):
        # ctx_ref: (TN, H) context tile, q_ref: (1, H), w_ref: (2, H), b_ref: (1, 2)
        # o_ref: (1, 2); scratch: m (1,1), l (1,1), acc (1,H) all f32.
        i = pl.program_id(0)

        @pl.when(i == 0)
        def _init():
            m_sc[...] = jnp.full_like(m_sc, -jnp.inf)
            l_sc[...] = jnp.zeros_like(l_sc)
            acc_sc[...] = jnp.zeros_like(acc_sc)

        ctx = ctx_ref[...]                               # native dtype tile
        q = q_ref[...].astype(ctx.dtype)

        # scores = q @ ctx^T / sqrt(H)  ->  lane-dense [1, TN]  (MXU)
        s = lax.dot_general(
            q, ctx, (((1,), (1,)), ((), ())),
            preferred_element_type=jnp.float32) * inv_sqrt_h

        if needs_mask:
            # Last block is partial: mask out-of-range columns / zero garbage rows so
            # they contribute exactly nothing (and cannot inject inf/NaN via 0*garbage).
            col = lax.broadcasted_iota(jnp.int32, (1, TN), 1) + i * TN
            s = jnp.where(col < N, s, -jnp.inf)
            row = lax.broadcasted_iota(jnp.int32, (TN, 1), 0) + i * TN
            ctx = jnp.where(row < N, ctx, jnp.zeros_like(ctx))

        m_prev = m_sc[...]
        m_new = jnp.maximum(m_prev, jnp.max(s, axis=-1, keepdims=True))   # [1, 1]
        alpha = jnp.exp(m_prev - m_new)
        p = jnp.exp(s - m_new)                                            # [1, TN] f32
        l_sc[...] = alpha * l_sc[...] + jnp.sum(p, axis=-1, keepdims=True)
        # Keep p in f32 (matches PyTorch f32 attention matmul); ctx upcast is a no-op
        # for f32 inputs.
        acc_sc[...] = alpha * acc_sc[...] + jnp.dot(
            p, ctx.astype(jnp.float32), preferred_element_type=jnp.float32)
        m_sc[...] = m_new

        @pl.when(i == pl.num_programs(0) - 1)
        def _finalize():
            doc = acc_sc[...] / l_sc[...]                                 # exact normalize, [1, H]
            logits = lax.dot_general(
                doc, w_ref[...].astype(jnp.float32), (((1,), (1,)), ((), ())),
                preferred_element_type=jnp.float32) + b_ref[...].astype(jnp.float32)
            lm = jnp.max(logits, axis=-1, keepdims=True)
            lse = lm + jnp.log(jnp.sum(jnp.exp(logits - lm), axis=-1, keepdims=True))
            o_ref[...] = (logits - lse).astype(o_ref.dtype)

    return kernel


def _pick_tn(N, H, dtype, budget_bytes):
    """Context rows per grid step: double-buffered ctx tile within the VMEM budget."""
    itemsize = jnp.dtype(dtype).itemsize
    rows = budget_bytes // (2 * max(1, H * itemsize))
    tn = max(8, min(2048, (rows // 8) * 8))
    return N if N <= tn else tn


def event_table_event_pred(sent_context_emb, event_query, event_cls_w, event_cls_b):
    """sent_context_emb: [N, H]; event_query: [1, H]; event_cls_w: [2, H]; event_cls_b: [2]."""
    N, H = sent_context_emb.shape
    dtype = sent_context_emb.dtype
    itemsize = jnp.dtype(dtype).itemsize
    tile_budget, vmem_limit, _ = _vmem_budgets()
    TN = _pick_tn(N, H, dtype, tile_budget)
    grid = (pl.cdiv(N, TN),)

    cost = pl.CostEstimate(
        flops=int(4 * N * H + 8 * H + 16),
        transcendentals=int(N + 8),
        bytes_accessed=int(N * H * itemsize + (3 * H + 4) * 4 + 8))

    return pl.pallas_call(
        _make_event_kernel(N, TN, H),
        out_shape=jax.ShapeDtypeStruct((1, 2), dtype),
        grid_spec=pltpu.PrefetchScalarGridSpec(
            num_scalar_prefetch=0,
            grid=grid,
            in_specs=[
                pl.BlockSpec((TN, H), lambda i: (i, 0)),   # ctx: streamed over N
                pl.BlockSpec((1, H), lambda i: (0, 0)),    # event_query (resident)
                pl.BlockSpec((2, H), lambda i: (0, 0)),    # event_cls weight (resident)
                pl.BlockSpec((1, 2), lambda i: (0, 0)),    # event_cls bias   (resident)
            ],
            out_specs=pl.BlockSpec((1, 2), lambda i: (0, 0)),
            scratch_shapes=[
                pltpu.VMEM((1, 1), jnp.float32),           # running max m
                pltpu.VMEM((1, 1), jnp.float32),           # running denom l
                pltpu.VMEM((1, H), jnp.float32),           # running weighted sum
            ]),
        compiler_params=pltpu.CompilerParams(
            dimension_semantics=("arbitrary",),            # online-softmax carry
            vmem_limit_bytes=vmem_limit),
        cost_estimate=cost,
    )(sent_context_emb, event_query, event_cls_w, event_cls_b.reshape(1, 2))


# ---------------------------------------------------------------------------
# Branch 2: field prediction (lane-dense [2, TB] logits / output)
# ---------------------------------------------------------------------------
def field_pred_kernel(x_ref, w_ref, b_ref, o_ref):
    # x_ref: (TB, H) VMEM; w_ref: (2, H) VMEM; b_ref: (2,) SMEM (f32); o_ref: (2, TB) VMEM.
    x = x_ref[...]
    w = w_ref[...].astype(x.dtype)
    # logits^T = W @ X^T  ->  [2, TB], batch on the lane axis (MXU)
    logits = lax.dot_general(
        w, x, (((1,), (1,)), ((), ())), preferred_element_type=jnp.float32)
    l0 = logits[0:1, :] + b_ref[0]                       # [1, TB]
    l1 = logits[1:2, :] + b_ref[1]                       # [1, TB]
    # log-softmax over the 2 classes, fully elementwise across lanes
    mx = jnp.maximum(l0, l1)
    lse = mx + jnp.log(jnp.exp(l0 - mx) + jnp.exp(l1 - mx))
    o_ref[0:1, :] = (l0 - lse).astype(o_ref.dtype)
    o_ref[1:2, :] = (l1 - lse).astype(o_ref.dtype)


def _pick_tb(B, H, dtype, budget_bytes, cap_rows):
    """Batch rows per grid step: multiple of 128 (lane-aligned output) within budget."""
    itemsize = jnp.dtype(dtype).itemsize
    rows = budget_bytes // (2 * max(1, H * itemsize))
    tb = max(128, min(cap_rows, (rows // 128) * 128))
    if B <= tb:
        if B >= 256 and B % 256 == 0:
            return B // 2          # >=2 grid steps so both v7x TensorCores get work
        return B                   # single full-extent block (no (8,128) constraint)
    return tb


def event_table_field_pred(batch_span_emb, field_cls_w, field_cls_b):
    """batch_span_emb: [B, H] or [H]; field_cls_w: [2, H]; field_cls_b: [2]."""
    if batch_span_emb.ndim == 1:                         # matches `batch_span_emb.unsqueeze(0)`
        batch_span_emb = batch_span_emb[None, :]
    B, H = batch_span_emb.shape
    dtype = batch_span_emb.dtype
    itemsize = jnp.dtype(dtype).itemsize
    tile_budget, vmem_limit, cap_rows = _vmem_budgets()
    TB = _pick_tb(B, H, dtype, tile_budget, cap_rows)
    grid = (pl.cdiv(B, TB),)                             # partial tail handled by Pallas (no pad)

    cost = pl.CostEstimate(
        flops=int(4 * B * H + 12 * B),
        transcendentals=int(2 * B),
        bytes_accessed=int(B * H * itemsize + 2 * B * itemsize + 2 * H * 4 + 8))

    out_t = pl.pallas_call(
        field_pred_kernel,
        out_shape=jax.ShapeDtypeStruct((2, B), dtype),
        grid_spec=pltpu.PrefetchScalarGridSpec(
            num_scalar_prefetch=0,
            grid=grid,
            in_specs=[
                pl.BlockSpec((TB, H), lambda i: (i, 0)),                    # span embeddings
                pl.BlockSpec((2, H), lambda i: (0, 0)),                     # field_cls weight
                pl.BlockSpec(memory_space=pltpu.MemorySpace.SMEM),          # field_cls bias (2,)
            ],
            out_specs=pl.BlockSpec((2, TB), lambda i: (0, i)),              # lane-dense output
        ),
        compiler_params=pltpu.CompilerParams(
            dimension_semantics=("parallel",),            # batch tiles are independent
            vmem_limit_bytes=vmem_limit),
        cost_estimate=cost,
    )(batch_span_emb, field_cls_w, field_cls_b.astype(jnp.float32))
    return out_t.T                                       # tiny [2, B] -> [B, 2] transpose


# ---------------------------------------------------------------------------
# Module-style dispatcher mirroring EventTable.forward
# ---------------------------------------------------------------------------
def event_table_forward(params, sent_context_emb=None, batch_span_emb=None, field_idx=None):
    assert (sent_context_emb is None) ^ (batch_span_emb is None)
    if sent_context_emb is not None:
        return event_table_event_pred(
            sent_context_emb, params["event_query"],
            params["event_cls_w"], params["event_cls_b"])
    assert field_idx is not None
    return event_table_field_pred(
        batch_span_emb,
        params["field_cls_w"][field_idx],
        params["field_cls_b"][field_idx])


# ---------------------------------------------------------------------------
# Pure-JAX references (mirror the PyTorch forward)
# ---------------------------------------------------------------------------
def event_pred_reference(ctx, q, w, b):
    H = ctx.shape[-1]
    scores = (q @ ctx.T) / math.sqrt(H)            # [1, N]
    p = jax.nn.softmax(scores, axis=-1)
    doc = p @ ctx                                  # [1, H]
    logits = doc @ w.T + b                         # [1, 2]
    return jax.nn.log_softmax(logits, axis=-1)


def field_pred_reference(x, w, b):
    logits = x @ w.T + b
    return jax.nn.log_softmax(logits, axis=-1)


if __name__ == "__main__":
    H = 32            # hidden_size
    N_SENT = 8        # num_spans + num_sents (doc-level contexts)
    B_SPANS = 16      # batch of candidate spans
    NUM_FIELDS = 3
    FIELD_IDX = 1

    key = jax.random.PRNGKey(0)
    k_ctx, k_span, k_eq, k_ew, k_eb, k_fw, k_fb = jax.random.split(key, 7)

    stdv = 1.0 / math.sqrt(H)
    sent_context_emb = jax.random.normal(k_ctx, (N_SENT, H), dtype=jnp.float32)
    batch_span_emb = jax.random.normal(k_span, (B_SPANS, H), dtype=jnp.float32)

    params = {
        # event_query ~ U(-stdv, stdv)   (reset_parameters)
        "event_query": jax.random.uniform(k_eq, (1, H), minval=-stdv, maxval=stdv,
                                          dtype=jnp.float32),
        # nn.Linear(H, 2): weight [2, H], bias [2], U(-1/sqrt(H), 1/sqrt(H))
        "event_cls_w": jax.random.uniform(k_ew, (2, H), minval=-stdv, maxval=stdv,
                                          dtype=jnp.float32),
        "event_cls_b": jax.random.uniform(k_eb, (2,), minval=-stdv, maxval=stdv,
                                          dtype=jnp.float32),
        "field_cls_w": jax.random.uniform(k_fw, (NUM_FIELDS, 2, H), minval=-stdv,
                                          maxval=stdv, dtype=jnp.float32),
        "field_cls_b": jax.random.uniform(k_fb, (NUM_FIELDS, 2), minval=-stdv,
                                          maxval=stdv, dtype=jnp.float32),
    }
    # TODO(synk): field_queries / none_emb_for_fields are module parameters that
    # forward() never reads; they are intentionally not materialized here.

    # Branch 1: event-trigger prediction
    doc_logp = event_table_forward(params, sent_context_emb=sent_context_emb)
    doc_logp = jax.block_until_ready(doc_logp)
    assert doc_logp.shape == (1, 2)
    ref1 = event_pred_reference(sent_context_emb, params["event_query"],
                                params["event_cls_w"], params["event_cls_b"])
    assert jnp.allclose(doc_logp, ref1, atol=1e-4, rtol=1e-4), "event branch mismatch"

    # Branch 2: field prediction
    span_logp = event_table_forward(params, batch_span_emb=batch_span_emb,
                                    field_idx=FIELD_IDX)
    span_logp = jax.block_until_ready(span_logp)
    assert span_logp.shape == (B_SPANS, 2)
    ref2 = field_pred_reference(batch_span_emb, params["field_cls_w"][FIELD_IDX],
                                params["field_cls_b"][FIELD_IDX])
    assert jnp.allclose(span_logp, ref2, atol=1e-5, rtol=1e-5), "field branch mismatch"

    print("KERNEL_OK")
</pallas_src>

<mosaic_0001>
module attributes {stable_mosaic.version = 11 : i64} {
  func.func @kernel(%arg0: i32, %arg1: memref<8x32xf32, #tpu.memory_space<vmem>>, %arg2: memref<1x32xf32, #tpu.memory_space<vmem>>, %arg3: memref<2x32xf32, #tpu.memory_space<vmem>>, %arg4: memref<1x2xf32, #tpu.memory_space<vmem>>, %arg5: memref<1x2xf32, #tpu.memory_space<vmem>>, %arg6: memref<1x1xf32, #tpu.memory_space<vmem>>, %arg7: memref<1x1xf32, #tpu.memory_space<vmem>>, %arg8: memref<1x32xf32, #tpu.memory_space<vmem>>) attributes {dimension_semantics = [#tpu.dimension_semantics<arbitrary>], iteration_bounds = array<i64: 1>, scalar_prefetch = 0 : i64, scratch_operands = 3 : i64, tpu.core_type = #tpu.core_type<tc>, window_params = [{transform_indices = @transform_0, window_bounds = array<i64: 8, 32>}, {pipeline_mode = #tpu.pipeline_mode<synchronous>, transform_indices = @transform_1, window_bounds = array<i64: 1, 32>}, {pipeline_mode = #tpu.pipeline_mode<synchronous>, transform_indices = @transform_2, window_bounds = array<i64: 2, 32>}, {pipeline_mode = #tpu.pipeline_mode<synchronous>, transform_indices = @transform_3, window_bounds = array<i64: 1, 2>}, {pipeline_mode = #tpu.pipeline_mode<synchronous>, transform_indices = @transform_4, window_bounds = array<i64: 1, 2>}]} {
    %c0_i32 = arith.constant 0 : i32
    %0 = arith.cmpi eq, %arg0, %c0_i32 : i32
    %1 = arith.extui %0 : i1 to i32
    %c0_i32_0 = arith.constant 0 : i32
    %2 = arith.cmpi ne, %1, %c0_i32_0 : i32
    scf.if %2 {
      %cst_22 = arith.constant 0xFF800000 : f32
      %33 = vector.broadcast %cst_22 : f32 to vector<1x1xf32>
      %c0_23 = arith.constant 0 : index
      %c0_24 = arith.constant 0 : index
      %34 = vector.load %arg6[%c0_23, %c0_24] : memref<1x1xf32, #tpu.memory_space<vmem>>, vector<1x1xf32>
      tpu.vector_store %arg6[%c0_23, %c0_24], %33 {strides = array<i32>} : memref<1x1xf32, #tpu.memory_space<vmem>>, vector<1x1xf32>,
      %cst_25 = arith.constant 0.000000e+00 : f32
      %35 = vector.broadcast %cst_25 : f32 to vector<1x1xf32>
      %c0_26 = arith.constant 0 : index
      %c0_27 = arith.constant 0 : index
      %36 = vector.load %arg7[%c0_26, %c0_27] : memref<1x1xf32, #tpu.memory_space<vmem>>, vector<1x1xf32>
      tpu.vector_store %arg7[%c0_26, %c0_27], %35 {strides = array<i32>} : memref<1x1xf32, #tpu.memory_space<vmem>>, vector<1x1xf32>,
      %cst_28 = arith.constant 0.000000e+00 : f32
      %37 = vector.broadcast %cst_28 : f32 to vector<1x32xf32>
      %c0_29 = arith.constant 0 : index
      %c0_30 = arith.constant 0 : index
      %38 = vector.load %arg8[%c0_29, %c0_30] : memref<1x32xf32, #tpu.memory_space<vmem>>, vector<1x32xf32>
      tpu.vector_store %arg8[%c0_29, %c0_30], %37 {strides = array<i32>} : memref<1x32xf32, #tpu.memory_space<vmem>>, vector<1x32xf32>,
    } else {
    }
    %c0 = arith.constant 0 : index
    %c0_1 = arith.constant 0 : index
    %3 = vector.load %arg1[%c0, %c0_1] : memref<8x32xf32, #tpu.memory_space<vmem>>, vector<8x32xf32>
    %c0_2 = arith.constant 0 : index
    %c0_3 = arith.constant 0 : index
    %4 = vector.load %arg2[%c0_2, %c0_3] : memref<1x32xf32, #tpu.memory_space<vmem>>, vector<1x32xf32>
    %cst = arith.constant dense<0.000000e+00> : vector<1x8xf32>
    %5 = tpu.matmul %4, %3, %cst {dimension_numbers = #tpu.dot_dimension_numbers<[1], [1], [0], [0], [0, 0, 1, 0], [], []>} : vector<1x32xf32>, vector<8x32xf32>, vector<1x8xf32> -> vector<1x8xf32>
    %cst_4 = arith.constant 0.176776692 : f32
    %6 = vector.broadcast %cst_4 : f32 to vector<1x8xf32>
    %7 = arith.mulf %5, %6 : vector<1x8xf32>
    %c0_5 = arith.constant 0 : index
    %c0_6 = arith.constant 0 : index
    %8 = vector.load %arg6[%c0_5, %c0_6] : memref<1x1xf32, #tpu.memory_space<vmem>>, vector<1x1xf32>
    %cst_7 = arith.constant dense<0xFF800000> : vector<1xf32>
    %9 = vector.multi_reduction <maximumf>, %7, %cst_7 [1] : vector<1x8xf32> to vector<1xf32>
    %10 = vector.shape_cast %9 : vector<1xf32> to vector<1x1xf32>
    %11 = arith.maximumf %8, %10 : vector<1x1xf32>
    %12 = arith.subf %8, %11 : vector<1x1xf32>
    %13 = math.exp %12 : vector<1x1xf32>
    %14 = vector.broadcast %11 : vector<1x1xf32> to vector<1x8xf32>
    %15 = arith.subf %7, %14 : vector<1x8xf32>
    %16 = math.exp %15 : vector<1x8xf32>
    %c0_8 = arith.constant 0 : index
    %c0_9 = arith.constant 0 : index
    %17 = vector.load %arg7[%c0_8, %c0_9] : memref<1x1xf32, #tpu.memory_space<vmem>>, vector<1x1xf32>
    %18 = arith.mulf %13, %17 : vector<1x1xf32>
    %cst_10 = arith.constant dense<0.000000e+00> : vector<1xf32>
    %19 = vector.multi_reduction <add>, %16, %cst_10 [1] : vector<1x8xf32> to vector<1xf32>
    %20 = vector.shape_cast %19 : vector<1xf32> to vector<1x1xf32>
    %21 = arith.addf %18, %20 : vector<1x1xf32>
    %c0_11 = arith.constant 0 : index
    %c0_12 = arith.constant 0 : index
    %22 = vector.load %arg7[%c0_11, %c0_12] : memref<1x1xf32, #tpu.memory_space<vmem>>, vector<1x1xf32>
    tpu.vector_store %arg7[%c0_11, %c0_12], %21 {strides = array<i32>} : memref<1x1xf32, #tpu.memory_space<vmem>>, vector<1x1xf32>,
    %c0_13 = arith.constant 0 : index
    %c0_14 = arith.constant 0 : index
    %23 = vector.load %arg8[%c0_13, %c0_14] : memref<1x32xf32, #tpu.memory_space<vmem>>, vector<1x32xf32>
    %24 = vector.broadcast %13 : vector<1x1xf32> to vector<1x32xf32>
    %25 = arith.mulf %24, %23 : vector<1x32xf32>
    %cst_15 = arith.constant dense<0.000000e+00> : vector<1x32xf32>
    %26 = tpu.matmul %16, %3, %cst_15 {dimension_numbers = #tpu.dot_dimension_numbers<[1], [0], [0], [1], [0, 0, 1, 1], [], []>} : vector<1x8xf32>, vector<8x32xf32>, vector<1x32xf32> -> vector<1x32xf32>
    %27 = arith.addf %25, %26 : vector<1x32xf32>
    %c0_16 = arith.constant 0 : index
    %c0_17 = arith.constant 0 : index
    %28 = vector.load %arg8[%c0_16, %c0_17] : memref<1x32xf32, #tpu.memory_space<vmem>>, vector<1x32xf32>
    tpu.vector_store %arg8[%c0_16, %c0_17], %27 {strides = array<i32>} : memref<1x32xf32, #tpu.memory_space<vmem>>, vector<1x32xf32>,
    %c0_18 = arith.constant 0 : index
    %c0_19 = arith.constant 0 : index
    %29 = vector.load %arg6[%c0_18, %c0_19] : memref<1x1xf32, #tpu.memory_space<vmem>>, vector<1x1xf32>
    tpu.vector_store %arg6[%c0_18, %c0_19], %11 {strides = array<i32>} : memref<1x1xf32, #tpu.memory_space<vmem>>, vector<1x1xf32>,
    %c0_i32_20 = arith.constant 0 : i32
    %30 = arith.cmpi eq, %arg0, %c0_i32_20 : i32
    %31 = arith.extui %30 : i1 to i32
    %c0_i32_21 = arith.constant 0 : i32
    %32 = arith.cmpi ne, %31, %c0_i32_21 : i32
    scf.if %32 {
      %c0_22 = arith.constant 0 : index
      %c0_23 = arith.constant 0 : index
      %33 = vector.load %arg8[%c0_22, %c0_23] : memref<1x32xf32, #tpu.memory_space<vmem>>, vector<1x32xf32>
      %c0_24 = arith.constant 0 : index
      %c0_25 = arith.constant 0 : index
      %34 = vector.load %arg7[%c0_24, %c0_25] : memref<1x1xf32, #tpu.memory_space<vmem>>, vector<1x1xf32>
      %35 = vector.broadcast %34 : vector<1x1xf32> to vector<1x32xf32>
      %36 = arith.divf %33, %35 : vector<1x32xf32>
      %c0_26 = arith.constant 0 : index
      %c0_27 = arith.constant 0 : index
      %37 = vector.load %arg3[%c0_26, %c0_27] : memref<2x32xf32, #tpu.memory_space<vmem>>, vector<2x32xf32>
      %cst_28 = arith.constant dense<0.000000e+00> : vector<1x2xf32>
      %38 = tpu.matmul %36, %37, %cst_28 {dimension_numbers = #tpu.dot_dimension_numbers<[1], [1], [0], [0], [0, 0, 1, 0], [], []>} : vector<1x32xf32>, vector<2x32xf32>, vector<1x2xf32> -> vector<1x2xf32>
      %c0_29 = arith.constant 0 : index
      %c0_30 = arith.constant 0 : index
      %39 = vector.load %arg4[%c0_29, %c0_30] : memref<1x2xf32, #tpu.memory_space<vmem>>, vector<1x2xf32>
      %40 = arith.addf %38, %39 : vector<1x2xf32>
      %cst_31 = arith.constant dense<0xFF800000> : vector<1xf32>
      %41 = vector.multi_reduction <maximumf>, %40, %cst_31 [1] : vector<1x2xf32> to vector<1xf32>
      %42 = vector.shape_cast %41 : vector<1xf32> to vector<1x1xf32>
      %43 = vector.broadcast %42 : vector<1x1xf32> to vector<1x2xf32>
      %44 = arith.subf %40, %43 : vector<1x2xf32>
      %45 = math.exp %44 : vector<1x2xf32>
      %cst_32 = arith.constant dense<0.000000e+00> : vector<1xf32>
      %46 = vector.multi_reduction <add>, %45, %cst_32 [1] : vector<1x2xf32> to vector<1xf32>
      %47 = vector.shape_cast %46 : vector<1xf32> to vector<1x1xf32>
      %48 = math.log %47 : vector<1x1xf32>
      %49 = arith.addf %42, %48 : vector<1x1xf32>
      %50 = vector.broadcast %49 : vector<1x1xf32> to vector<1x2xf32>
      %51 = arith.subf %40, %50 : vector<1x2xf32>
      %c0_33 = arith.constant 0 : index
      %c0_34 = arith.constant 0 : index
      %52 = vector.load %arg5[%c0_33, %c0_34] : memref<1x2xf32, #tpu.memory_space<vmem>>, vector<1x2xf32>
      tpu.vector_store %arg5[%c0_33, %c0_34], %51 {strides = array<i32>} : memref<1x2xf32, #tpu.memory_space<vmem>>, vector<1x2xf32>,
    } else {
    }
    return
  }
  func.func @transform_0(%arg0: i32) -> (i32, i32) {
    %c0_i32 = arith.constant 0 : i32
    %c0_i32_0 = arith.constant 0 : i32
    return %arg0, %c0_i32 : i32, i32
  }
  func.func @transform_1(%arg0: i32) -> (i32, i32) {
    %c0_i32 = arith.constant 0 : i32
    %c0_i32_0 = arith.constant 0 : i32
    %c0_i32_1 = arith.constant 0 : i32
    return %c0_i32, %c0_i32_0 : i32, i32
  }
  func.func @transform_2(%arg0: i32) -> (i32, i32) {
    %c0_i32 = arith.constant 0 : i32
    %c0_i32_0 = arith.constant 0 : i32
    %c0_i32_1 = arith.constant 0 : i32
    return %c0_i32, %c0_i32_0 : i32, i32
  }
  func.func @transform_3(%arg0: i32) -> (i32, i32) {
    %c0_i32 = arith.constant 0 : i32
    %c0_i32_0 = arith.constant 0 : i32
    %c0_i32_1 = arith.constant 0 : i32
    return %c0_i32, %c0_i32_0 : i32, i32
  }
  func.func @transform_4(%arg0: i32) -> (i32, i32) {
    %c0_i32 = arith.constant 0 : i32
    %c0_i32_0 = arith.constant 0 : i32
    %c0_i32_1 = arith.constant 0 : i32
    return %c0_i32, %c0_i32_0 : i32, i32
  }
}

</mosaic_0001>

<llo_original>
// kernel: tpu_custom_call.1
$region0: #{tpu_custom_call.1}
  #allocation0 [shape = 'u32[]', space=smem, size = 0x4, offset = 0x4, fixed_abs, tag = 'smem constant byte address 0x4 - core index']
  #allocation1 [shape = 'u32[72,128]{1,0:T(1,128)}', space=vmem, size = 0x9000, scoped, tag = 'internal scratch']
  #allocation2 [shape = 'f32[1,1]{1,0:T(1,128)}', space=vmem, size = 0x200, scoped, tag = 'scratch operand']
  #allocation3 [shape = 'f32[1,1]{1,0:T(1,128)}', space=vmem, size = 0x200, scoped, tag = 'scratch operand']
  #allocation4 [shape = 'f32[1,32]{1,0:T(1,128)}', space=vmem, size = 0x200, scoped, tag = 'scratch operand']
  %s0 = inlined_call_operand.hbm [shape: f32[8,32], index: 0, kind: input, shape index: {}]
  %s1 = inlined_call_operand.hbm [shape: f32[1,32], index: 1, kind: input, shape index: {}]
  %s2 = inlined_call_operand.hbm [shape: f32[2,32], index: 2, kind: input, shape index: {}]
  %s3 = inlined_call_operand.vmem [shape: f32[1,2], index: 3, kind: input, shape index: {}]
  %s4 = inlined_call_operand.hbm [shape: f32[1,2], index: 4, kind: output, shape index: {}]
  %s5 = sld [smem:[#allocation0]]
  $region46: #{tpu_custom_call.1} parent=0
    _
  %s7 = ssub.s32 1, %s5
  %s8 = scalar_select 0, %s7, %s5
  $region1: #{tpu_custom_call.1} parent=0
    #allocation5 [shape = 'u8[4096]{0}', space=vmem, size = 0x1000, scoped, tag = 'input window, operand 0, single buffered']
    #allocation6 [shape = 's32[1]{0}', space=sflag, size = 0x4, scoped, tag = 'scoped memory for tpu_custom_call.1']
    #allocation7 [shape = 's32[1]{0}', space=sflag, size = 0x4, scoped, tag = 'scoped memory for tpu_custom_call.1']
    #allocation8 [shape = 'u8[512]{0}', space=vmem, size = 0x400, scoped, tag = 'input window, operand 1, single buffered']
    #allocation9 [shape = 's32[1]{0}', space=sflag, size = 0x4, scoped, tag = 'scoped memory for tpu_custom_call.1']
    #allocation10 [shape = 'u8[1024]{0}', space=vmem, size = 0x400, scoped, tag = 'input window, operand 2, single buffered']
    #allocation11 [shape = 'u8[512]{0}', space=vmem, size = 0x400, scoped, tag = 'output window, operand 0, single buffered']
    %9 = vsyncpa [#allocation6], 0
    %10 = vsyncpa [#allocation9], 0
    %11 = vsyncpa [#allocation7], 0
    // Predicated region
    $region2: #{tpu_custom_call.1} parent=1 // pred_check
      _
    $region3: #{tpu_custom_call.1} parent=1 // pred_check_branch
      %13 = sbr.rel (0) target = $region5
    $region4: #{tpu_custom_call.1} parent=1 // pred_region
      %15 = vsyncadd [#allocation6], 0
      %s17 = sshll.u32 %s0, 4
      %s18 = int_to_ptr.hbm [resolvable:$true] %s17
      %s19 = sshll.u32 [#allocation5], 4
      %s20 = int_to_ptr.vmem [resolvable:$true] %s19
      %22 = dma.hbm_to_vmem [thread:$0]  %s18, 128, %s20, [#allocation6]
    $region5: #{tpu_custom_call.1} parent=1 // pred_fallthru
      _
    // Predicated region
    $region6: #{tpu_custom_call.1} parent=1 // pred_check
      _
    $region7: #{tpu_custom_call.1} parent=1 // pred_check_branch
      %24 = sbr.rel (0) target = $region9
    $region8: #{tpu_custom_call.1} parent=1 // pred_region
      %26 = vsyncadd [#allocation9], 0
      %s28 = sshll.u32 %s1, 4
      %s29 = int_to_ptr.hbm [resolvable:$true] %s28
      %s30 = sshll.u32 [#allocation8], 4
      %s31 = int_to_ptr.vmem [resolvable:$true] %s30
      %33 = dma.hbm_to_vmem [thread:$0]  %s29, 16, %s31, [#allocation9]
    $region9: #{tpu_custom_call.1} parent=1 // pred_fallthru
      _
    // Predicated region
    $region10: #{tpu_custom_call.1} parent=1 // pred_check
      _
    $region11: #{tpu_custom_call.1} parent=1 // pred_check_branch
      %35 = sbr.rel (0) target = $region13
    $region12: #{tpu_custom_call.1} parent=1 // pred_region
      %37 = vsyncadd [#allocation9], 0
      %s39 = sshll.u32 %s2, 4
      %s40 = int_to_ptr.hbm [resolvable:$true] %s39
      %s41 = sshll.u32 [#allocation10], 4
      %s42 = int_to_ptr.vmem [resolvable:$true] %s41
      %44 = dma.hbm_to_vmem [thread:$0]  %s40, 32, %s42, [#allocation9]
    $region13: #{tpu_custom_call.1} parent=1 // pred_fallthru
      _
    // Predicated region
    $region14: #{tpu_custom_call.1} parent=1 // pred_check
      _
    $region15: #{tpu_custom_call.1} parent=1 // pred_check_branch
      %46 = sbr.rel (0) target = $region17
    $region16: #{tpu_custom_call.1} parent=1 // pred_region
      _
    $region17: #{tpu_custom_call.1} parent=1 // pred_fallthru
      _
    // Predicated region
    $region18: #{tpu_custom_call.1} parent=1 // pred_check
      _
    $region19: #{tpu_custom_call.1} parent=1 // pred_check_branch
      %48 = sbr.rel (0) target = $region21
    $region20: #{tpu_custom_call.1} parent=1 // pred_region
      %50 = dma.done [#allocation6], 128
    $region21: #{tpu_custom_call.1} parent=1 // pred_fallthru
      _
    // Predicated region
    $region22: #{tpu_custom_call.1} parent=1 // pred_check
      _
    $region23: #{tpu_custom_call.1} parent=1 // pred_check_branch
      %52 = sbr.rel (0) target = $region25
    $region24: #{tpu_custom_call.1} parent=1 // pred_region
      %54 = dma.done [#allocation9], 16
    $region25: #{tpu_custom_call.1} parent=1 // pred_fallthru
      _
    // Predicated region
    $region26: #{tpu_custom_call.1} parent=1 // pred_check
      _
    $region27: #{tpu_custom_call.1} parent=1 // pred_check_branch
      %56 = sbr.rel (0) target = $region29
    $region28: #{tpu_custom_call.1} parent=1 // pred_region
      %58 = dma.done [#allocation9], 32
    $region29: #{tpu_custom_call.1} parent=1 // pred_fallthru
      _
    %p59 = scmp.eq.s32.totalorder 0, 0
    // Predicated region
    $region30: #{tpu_custom_call.1} parent=1 // pred_check
      %p60 = pneg %p59
    $region31: #{tpu_custom_call.1} parent=1 // pred_check_branch
      %62 = sbr.rel (%p60) target = $region33
    $region32: #{tpu_custom_call.1} parent=1 // pred_region
      %vm63 = vcmask 0
      %64 = vst.msk [vmem:[#allocation2] sm:$0x1] %vm63, -inf
      %65 = vst.msk [vmem:[#allocation3] sm:$0x1] %vm63, 0.0
      %vm66 = vcmask 253952
      %67 = vst.msk [vmem:[#allocation4] sm:$0x1] %vm66, 0.0
    $region33: #{tpu_custom_call.1} parent=1 // pred_fallthru
      _
    %v68 = vld [vmem:[#allocation5] sm:$0xff]
    %v69 = vld [vmem:[#allocation8] sm:$0x1]
    %vm70 = vcmask 261120
    %v72 = vsel %vm70, %v69, 0
    %v75 = vsel %vm70, %v68, 0
    %77 = vmatpush.xpose.msra.mxu0 0.0
    %78 = vmatpush.xpose.msra.mxu0 0.0
    %79 = vmatpush.xpose.msra.mxu0 0.0
    %80 = vmatpush.xpose.msra.mxu0 0.0
    %81 = vmatpush.xpose.msra.mxu0 0.0
    %82 = vmatpush.xpose.msra.mxu0 0.0
    %83 = vmatpush.xpose.msra.mxu0 0.0
    %84 = vmatpush.xpose.msra.mxu0 0.0
    %85 = vmatpush.xpose.msra.mxu0 0.0
    %86 = vmatpush.xpose.msra.mxu0 0.0
    %87 = vmatpush.xpose.msra.mxu0 0.0
    %88 = vmatpush.xpose.msra.mxu0 0.0
    %89 = vmatpush.xpose.msra.mxu0 0.0
    %90 = vmatpush.xpose.msra.mxu0 0.0
    %91 = vmatpush.xpose.msra.mxu0 0.0
    %92 = vmatpush.xpose.msra.mxu0 %v75
    %93 = vmatmul.f32.gmra.mxu0 %v72
    %v94 = vpop.f32.mrf.mxu0
    %v95 = vadd.f32 0.0, %v94
    %96 = vdwg.mxu0
    %v97 = vmul.f32 %v95, 0.17677669
    %v98 = vld [vmem:[#allocation2] sm:$0x1]
    %vm99 = vcmask 57344
    %v100 = vsel %vm99, %v97, -inf
    %101 = vmax.xlane.f32.xlu0 %v100
    %v102 = vpop.xlane.xlu0 %101
    %v103 = vmax.f32 %v98, %v102
    %v104 = vsub.f32 %v98, %v103
    %v105 = vmul.f32 %v104, 1.442695
    %v106 = vpow.pop %v105
    %108 = vset.pattern.permute.xlu0 0
    %109 = vperm.xlu0 %108, %v103
    %v110 = vpop.permute.xlu0 %109
    %v112 = vperm.slane %v110, 0
    %v113 = vsub.f32 %v97, %v112
    %v114 = vmul.f32 %v113, 1.442695
    %v115 = vpow.pop %v114
    %v116 = vld [vmem:[#allocation3] sm:$0x1]
    %v117 = vmul.f32 %v106, %v116
    %v118 = vsel %vm99, %v115, 0.0
    %119 = vadd.xlane.f32.xlu0 %v118
    %v120 = vpop.xlane.xlu0 %119
    %v121 = vadd.f32 %v117, %v120
    %vm122 = vcmask 0
    %123 = vst.msk [vmem:[#allocation3] sm:$0x1] %vm122, %v121
    %v124 = vld [vmem:[#allocation4] sm:$0x1]
    %126 = vset.pattern.permute.xlu0 0
    %127 = vperm.xlu0 %126, %v106
    %v128 = vpop.permute.xlu0 %127
    %v130 = vperm.slane %v128, 0
    %v131 = vmul.f32 %v130, %v124
    %vm132 = vcmask 64512
    %v134 = vsel %vm132, %v115, 0
    %136 = vmatpush.msra.mxu0 0.0
    %137 = vmatpush.msra.mxu0 0.0
    %138 = vmatpush.msra.mxu0 0.0
    %139 = vmatpush.msra.mxu0 0.0
    %140 = vmatpush.msra.mxu0 0.0
    %141 = vmatpush.msra.mxu0 0.0
    %142 = vmatpush.msra.mxu0 0.0
    %143 = vmatpush.msra.mxu0 0.0
    %144 = vmatpush.msra.mxu0 0.0
    %145 = vmatpush.msra.mxu0 0.0
    %146 = vmatpush.msra.mxu0 0.0
    %147 = vmatpush.msra.mxu0 0.0
    %148 = vmatpush.msra.mxu0 0.0
    %149 = vmatpush.msra.mxu0 0.0
    %150 = vmatpush.msra.mxu0 0.0
    %151 = vmatpush.msra.mxu0 %v68
    %152 = vmatmul.f32.gmra.mxu0 %v134
    %v153 = vpop.f32.mrf.mxu0
    %v154 = vadd.f32 0.0, %v153
    %155 = vdwg.mxu0
    %v156 = vadd.f32 %v131, %v154
    %vm157 = vcmask 253952
    %158 = vst.msk [vmem:[#allocation4] sm:$0x1] %vm157, %v156
    %159 = vst.msk [vmem:[#allocation2] sm:$0x1] %vm122, %v103
    // Predicated region
    $region34: #{tpu_custom_call.1} parent=1 // pred_check
      %p160 = pneg %p59
    $region35: #{tpu_custom_call.1} parent=1 // pred_check_branch
      %162 = sbr.rel (%p160) target = $region37
    $region36: #{tpu_custom_call.1} parent=1 // pred_region
      %v163 = vld [vmem:[#allocation4] sm:$0x1]
      %v164 = vld [vmem:[#allocation3] sm:$0x1]
      %166 = vset.pattern.permute.xlu0 0
      %167 = vperm.xlu0 %166, %v164
      %v168 = vpop.permute.xlu0 %167
      %v170 = vperm.slane %v168, 0
      %v171 = vrcp.pop %v170
      %v172 = vmul.f32 %v170, %v171
      %v173 = vsub.f32 1.0, %v172
      %v174 = vmul.f32 %v171, %v173
      %v175 = vadd.f32 %v171, %v174
      %vm176 = vweird.f32 %v170
      %vm177 = vweird.f32 %v171
      %vm178 = vmor %vm176, %vm177
      %v179 = vsel %vm178, %v171, %v175
      %v180 = vand.u32 2147483647, %v170
      %vm181 = vcmp.eq.f32.partialorder %v180, 8.507059e+37
      %v182 = vand.u32 %v170, 2147483648
      %v183 = vor.u32 1.1754944e-38, %v182
      %v184 = vsel %vm181, %v183, %v179
      %v185 = vmul.f32 %v163, %v184
      %v186 = vld [vmem:[#allocation10] sm:$0x3]
      %v187 = vld [vmem:[%s3] sm:$0x1]
      %v189 = vsel %vm70, %v185, 0
      %v192 = vsel %vm70, %v186, 0
      %194 = vmatpush.xpose.msra.mxu0 0.0
      %195 = vmatpush.xpose.msra.mxu0 0.0
      %196 = vmatpush.xpose.msra.mxu0 0.0
      %197 = vmatpush.xpose.msra.mxu0 0.0
      %198 = vmatpush.xpose.msra.mxu0 0.0
      %199 = vmatpush.xpose.msra.mxu0 0.0
      %200 = vmatpush.xpose.msra.mxu0 0.0
      %201 = vmatpush.xpose.msra.mxu0 0.0
      %202 = vmatpush.xpose.msra.mxu0 0.0
      %203 = vmatpush.xpose.msra.mxu0 0.0
      %204 = vmatpush.xpose.msra.mxu0 0.0
      %205 = vmatpush.xpose.msra.mxu0 0.0
      %206 = vmatpush.xpose.msra.mxu0 0.0
      %207 = vmatpush.xpose.msra.mxu0 0.0
      %208 = vmatpush.xpose.msra.mxu0 0.0
      %209 = vmatpush.xpose.msra.mxu0 %v192
      %210 = vmatmul.f32.gmra.mxu0 %v189
      %v211 = vpop.f32.mrf.mxu0
      %v212 = vadd.f32 %v187, %v211
      %213 = vdwg.mxu0
      %vm214 = vcmask 8192
      %v215 = vsel %vm214, %v212, -inf
      %216 = vmax.xlane.f32.xlu0 %v215
      %v217 = vpop.xlane.xlu0 %216
      %v218 = vsub.f32 %v212, %v217
      %v219 = vmul.f32 %v218, 1.442695
      %v220 = vpow.pop %v219
      %v221 = vsel %vm214, %v220, 0.0
      %222 = vadd.xlane.f32.xlu0 %v221
      %v223 = vpop.xlane.xlu0 %222
      %v224 = vlog2.pop %v223
      %v225 = vmul.f32 %v224, 0.6931472
      %v226 = vadd.f32 %v217, %v225
      %v227 = vsub.f32 %v212, %v226
      %228 = vst.msk [vmem:[#allocation11] sm:$0x1] %vm214, %v227
    $region37: #{tpu_custom_call.1} parent=1 // pred_fallthru
      _
    // Predicated region
    $region38: #{tpu_custom_call.1} parent=1 // pred_check
      _
    $region39: #{tpu_custom_call.1} parent=1 // pred_check_branch
      %230 = sbr.rel (0) target = $region41
    $region40: #{tpu_custom_call.1} parent=1 // pred_region
      %232 = vsyncadd [#allocation7], 0
      %s234 = sshll.u32 [#allocation11], 4
      %s235 = int_to_ptr.vmem [resolvable:$true] %s234
      %s236 = sshll.u32 %s4, 4
      %s237 = int_to_ptr.hbm [resolvable:$true] %s236
      %239 = dma.vmem_to_hbm [thread:$0]  %s235, 16, %s237, [#allocation7]
    $region41: #{tpu_custom_call.1} parent=1 // pred_fallthru
      _
    // Predicated region
    $region42: #{tpu_custom_call.1} parent=1 // pred_check
      _
    $region43: #{tpu_custom_call.1} parent=1 // pred_check_branch
      %241 = sbr.rel (0) target = $region45
    $region44: #{tpu_custom_call.1} parent=1 // pred_region
      %243 = dma.done [#allocation7], 16
    $region45: #{tpu_custom_call.1} parent=1 // pred_fallthru
      _
    %244 = vsyncpa [#allocation6], 1
    %245 = vsyncpa [#allocation9], 1
    %246 = vsyncpa [#allocation7], 1

</llo_original>
